<compile_context>
chip_gen: v5e
topology: v5e:2x2
jax: 0.10.0
libtpu: 0.0.40
codegen_flags: <defaults>
</compile_context>

<pallas_src>
import functools

import jax
import jax.numpy as jnp
from jax import lax
from jax.experimental import pallas as pl
from jax.experimental.pallas import tpu as pltpu


# ----------------------------------------------------------------------------
# Kernel: one grid point == one batch tile; full sequence recurrence in-kernel.
# PyTorch LSTM gate order is (i, f, g, o):
#   i,f,o = sigmoid(.), g = tanh(.)
#   c_t = f*c_{t-1} + i*g ;  h_t = o*tanh(c_t)
# ----------------------------------------------------------------------------
def lstm_recurrence_kernel(xproj_ref, whh_ref, wout_ref, bout_ref,
                           rnn_out_ref, logits_ref, *, unroll):
    S, Bb, H4 = xproj_ref.shape
    H = H4 // 4

    whh = whh_ref[...]                                    # (H, 4H), loaded once

    def step(t, carry):
        h_prev, c_prev = carry                            # (Bb, H) each, in vregs
        # Input projection + bias are precomputed; only the recurrent matmul
        # lives on the serial critical path.
        gates = xproj_ref[t] + jnp.dot(
            h_prev, whh, preferred_element_type=jnp.float32)   # (Bb, 4H)

        # Sigmoid over the full vreg (3/4 lanes used: i, f, o); tanh only on the
        # g slice so the single EUP does ~30% less work per serial step.
        sig = jax.nn.sigmoid(gates)
        g_g = jnp.tanh(gates[:, 2 * H:3 * H])
        i_g = sig[:, 0 * H:1 * H]
        f_g = sig[:, 1 * H:2 * H]
        o_g = sig[:, 3 * H:4 * H]

        c_new = f_g * c_prev + i_g * g_g
        h_new = o_g * jnp.tanh(c_new)

        rnn_out_ref[t] = h_new.astype(rnn_out_ref.dtype)  # VMEM store; HBM DMA once
        return (h_new, c_new)

    h0 = jnp.zeros((Bb, H), jnp.float32)
    c0 = jnp.zeros((Bb, H), jnp.float32)
    h_last, _ = lax.fori_loop(0, S, step, (h0, c0), unroll=unroll)

    # out = Linear(rnn_out[-1]); Dropout(0.2) is identity in eval mode.
    logits_ref[...] = (
        jnp.dot(h_last, wout_ref[...], preferred_element_type=jnp.float32)
        + bout_ref[...]).astype(logits_ref.dtype)


# ----------------------------------------------------------------------------
# Tile-size policy helpers.
# ----------------------------------------------------------------------------
def _round_up(n, m):
    return -(-n // m) * m


def _tile_vmem_bytes(S, bb, H4, H, C):
    """Padded (sublane 8 / lane 128) VMEM estimate for one batch tile, f32."""
    lane = lambda n: _round_up(n, 128)
    sub = lambda n: _round_up(n, 8)
    f32 = 4
    xproj = 2 * S * sub(bb) * lane(H4) * f32        # double-buffered input block
    rnn = 2 * S * sub(bb) * lane(H) * f32           # double-buffered output block
    logits = 2 * sub(bb) * lane(C) * f32
    weights = 2 * (sub(H) * lane(H4) + sub(H) * lane(C) + 8 * lane(C)) * f32
    return xproj + rnn + logits + weights


def _num_tensorcores():
    """Best-effort TensorCores per device (2 on v7x megacore, else 1)."""
    try:
        dev = jax.devices()[0]
        n = int(getattr(dev, "num_cores", 1) or 1)
        if n > 1:
            return n
        kind = str(getattr(dev, "device_kind", "")).lower()
        return 2 if "v7" in kind else 1
    except Exception:  # pragma: no cover - defensive
        return 1


def _pick_b_block(S, B, H4, H, C, *, num_tc, vmem_budget):
    # Candidates: the whole batch (always a legal block: bb == full dim), then
    # divisors of B that are multiples of 8 (the (8,128) sublane rule), widest
    # first.  Split only if VMEM forces it or to feed a second TensorCore.
    cands = [B] + [d for d in range(B - 1, 0, -1) if B % d == 0 and d % 8 == 0]
    fitting = [d for d in cands if _tile_vmem_bytes(S, d, H4, H, C) <= vmem_budget]
    if not fitting:
        fitting = [cands[-1]]
    if num_tc > 1:
        for d in fitting:
            if B // d >= num_tc:        # at least one tile per TensorCore (v7x)
                return d
    return fitting[0]


# ----------------------------------------------------------------------------
# pallas_call wrapper.
# ----------------------------------------------------------------------------
def lstm_net_forward(xproj_seq, w_hh_t, w_out_t, b_out, *, b_block=None):
    """xproj_seq: (S, B, 4H) time-major fused input projection (bias folded in).
    w_hh_t: (H, 4H), w_out_t: (H, C), b_out: (1, C)."""
    S, B, H4 = xproj_seq.shape
    H = H4 // 4
    C = w_out_t.shape[1]

    num_tc = _num_tensorcores()
    vmem_budget = 24 << 20            # conservative vs. v7x's 64 MiB physical VMEM
    if b_block is None:
        b_block = _pick_b_block(S, B, H4, H, C,
                                num_tc=num_tc, vmem_budget=vmem_budget)
    assert B % b_block == 0
    nb = B // b_block

    est = _tile_vmem_bytes(S, b_block, H4, H, C)
    vmem_limit = int(min(60 << 20, max(32 << 20, 2 * est)))

    # Full unroll for short sequences; partial unroll for long ones to keep LLO
    # scheduling visibility without exhausting the 64-vreg file.
    unroll = min(S, 8)

    rnn_out, logits = pl.pallas_call(
        functools.partial(lstm_recurrence_kernel, unroll=unroll),
        out_shape=(
            jax.ShapeDtypeStruct((S, B, H), jnp.float32),
            jax.ShapeDtypeStruct((B, C), jnp.float32),
        ),
        grid_spec=pltpu.PrefetchScalarGridSpec(
            num_scalar_prefetch=0,
            grid=(nb,),                                          # batch tiles only
            in_specs=[
                pl.BlockSpec((S, b_block, H4), lambda bi: (0, bi, 0)),  # xproj
                pl.BlockSpec((H, H4), lambda bi: (0, 0)),               # W_hh^T
                pl.BlockSpec((H, C), lambda bi: (0, 0)),                # W_out^T
                pl.BlockSpec((1, C), lambda bi: (0, 0)),                # b_out
            ],
            out_specs=[
                pl.BlockSpec((S, b_block, H), lambda bi: (0, bi, 0)),   # rnn_out
                pl.BlockSpec((b_block, C), lambda bi: (bi, 0)),         # logits
            ],
        ),
        compiler_params=pltpu.CompilerParams(
            dimension_semantics=("parallel",),    # batch tiles are independent
            vmem_limit_bytes=vmem_limit),
    )(xproj_seq, w_hh_t, w_out_t, b_out)
    return rnn_out, logits


# ----------------------------------------------------------------------------
# Parameter construction (deterministic, mimics the module's __init__).
# ----------------------------------------------------------------------------
def make_params(key, vocab_size, emb_dim, h_dim, num_classes):
    ks = jax.random.split(key, 6)

    # Embedding (vocab_size+1, emb_dim), xavier_uniform, padding_idx=0 -> zero row.
    fan_in, fan_out = vocab_size + 1, emb_dim
    limit = (6.0 / (fan_in + fan_out)) ** 0.5
    emb_table = jax.random.uniform(ks[0], (vocab_size + 1, emb_dim),
                                   jnp.float32, -limit, limit)
    emb_table = emb_table.at[0].set(0.0)

    # LSTM params (PyTorch default init: U(-1/sqrt(H), 1/sqrt(H))).
    k = 1.0 / (h_dim ** 0.5)
    w_ih = jax.random.uniform(ks[1], (4 * h_dim, emb_dim), jnp.float32, -k, k)
    w_hh = jax.random.uniform(ks[2], (4 * h_dim, h_dim), jnp.float32, -k, k)
    b_ih = jax.random.uniform(ks[3], (4 * h_dim,), jnp.float32, -k, k)
    b_hh = jax.random.uniform(ks[4], (4 * h_dim,), jnp.float32, -k, k)

    # Output linear: xavier_normal weight, zero bias.
    std = (2.0 / (h_dim + num_classes)) ** 0.5
    w_out = jax.random.normal(ks[5], (num_classes, h_dim), jnp.float32) * std
    b_out = jnp.zeros((num_classes,), jnp.float32)

    return dict(emb_table=emb_table, w_ih=w_ih, w_hh=w_hh,
                b_ih=b_ih, b_hh=b_hh, w_out=w_out, b_out=b_out)


def lstm_net_apply(params, x):
    """x: (batch, seq) int32 token ids. Returns (rnn_out, logits)."""
    # Algebraic fusion: embedding gather -> input projection -> bias collapses
    # into one gather of a precomputed (vocab+1, 4H) table (projection is
    # linear, padding row 0 stays consistent since 0 @ W^T + b == b).
    proj_table = (params["emb_table"] @ params["w_ih"].T
                  + (params["b_ih"] + params["b_hh"]))          # (V+1, 4H)
    xproj = jnp.take(proj_table, x, axis=0)                     # (B, S, 4H)
    xproj_seq = jnp.transpose(xproj, (1, 0, 2))                 # (S, B, 4H)

    w_hh_t = params["w_hh"].T                                   # (H, 4H)
    w_out_t = params["w_out"].T                                 # (H, C)
    b_out = params["b_out"].reshape(1, -1)                      # (1, C)

    rnn_out, logits = lstm_net_forward(xproj_seq, w_hh_t, w_out_t, b_out)
    # Dropout(0.2) is identity at inference time.
    # TODO(synk): training-mode dropout mask not implemented (eval semantics used).
    return rnn_out, logits


# Pure-JAX reference (lax.scan LSTM, unfused embedding + projection) for checking.
def reference_apply(params, x):
    emb = jnp.take(params["emb_table"], x, axis=0)
    emb_seq = jnp.transpose(emb, (1, 0, 2))                     # (S, B, E)
    S, B, E = emb_seq.shape
    H = params["w_hh"].shape[1]
    w_ih, w_hh = params["w_ih"].T, params["w_hh"].T
    b = params["b_ih"] + params["b_hh"]

    def step(carry, x_t):
        h, c = carry
        gates = x_t @ w_ih + h @ w_hh + b
        i = jax.nn.sigmoid(gates[:, 0 * H:1 * H])
        f = jax.nn.sigmoid(gates[:, 1 * H:2 * H])
        g = jnp.tanh(gates[:, 2 * H:3 * H])
        o = jax.nn.sigmoid(gates[:, 3 * H:4 * H])
        c = f * c + i * g
        h = o * jnp.tanh(c)
        return (h, c), h

    init = (jnp.zeros((B, H), jnp.float32), jnp.zeros((B, H), jnp.float32))
    (_, _), hs = jax.lax.scan(step, init, emb_seq)
    logits = hs[-1] @ params["w_out"].T + params["b_out"]
    return hs, logits


if __name__ == "__main__":
    vocab_size, emb_dim, h_dim, num_classes = 50, 16, 32, 4
    batch, seq = 8, 8

    key = jax.random.PRNGKey(0)
    pkey, xkey = jax.random.split(key)
    params = make_params(pkey, vocab_size, emb_dim, h_dim, num_classes)

    x = jax.random.randint(xkey, (batch, seq), 0, vocab_size + 1, dtype=jnp.int32)

    rnn_out, logits = lstm_net_apply(params, x)
    jax.block_until_ready(logits)

    ref_rnn_out, ref_logits = reference_apply(params, x)
    assert jnp.allclose(rnn_out, ref_rnn_out, atol=1e-5, rtol=1e-5)
    assert jnp.allclose(logits, ref_logits, atol=1e-5, rtol=1e-5)

    print("KERNEL_OK")
</pallas_src>

<mosaic_0001>
module attributes {stable_mosaic.version = 11 : i64} {
  func.func @lstm_recurrence_kernel(%arg0: i32, %arg1: memref<8x8x128xf32, #tpu.memory_space<vmem>>, %arg2: memref<32x128xf32, #tpu.memory_space<vmem>>, %arg3: memref<32x4xf32, #tpu.memory_space<vmem>>, %arg4: memref<1x4xf32, #tpu.memory_space<vmem>>, %arg5: memref<8x8x32xf32, #tpu.memory_space<vmem>>, %arg6: memref<8x4xf32, #tpu.memory_space<vmem>>) attributes {dimension_semantics = [#tpu.dimension_semantics<parallel>], iteration_bounds = array<i64: 1>, scalar_prefetch = 0 : i64, scratch_operands = 0 : i64, tpu.core_type = #tpu.core_type<tc>, window_params = [{transform_indices = @transform_0, window_bounds = array<i64: 8, 8, 128>}, {pipeline_mode = #tpu.pipeline_mode<synchronous>, transform_indices = @transform_1, window_bounds = array<i64: 32, 128>}, {pipeline_mode = #tpu.pipeline_mode<synchronous>, transform_indices = @transform_2, window_bounds = array<i64: 32, 4>}, {pipeline_mode = #tpu.pipeline_mode<synchronous>, transform_indices = @transform_3, window_bounds = array<i64: 1, 4>}, {transform_indices = @transform_4, window_bounds = array<i64: 8, 8, 32>}, {transform_indices = @transform_5, window_bounds = array<i64: 8, 4>}]} {
    %c0 = arith.constant 0 : index
    %c0_0 = arith.constant 0 : index
    %0 = vector.load %arg2[%c0, %c0_0] : memref<32x128xf32, #tpu.memory_space<vmem>>, vector<32x128xf32>
    %cst = arith.constant 0.000000e+00 : f32
    %1 = vector.broadcast %cst : f32 to vector<8x32xf32>
    %cst_1 = arith.constant 0.000000e+00 : f32
    %2 = vector.broadcast %cst_1 : f32 to vector<8x32xf32>
    %c0_i32 = arith.constant 0 : i32
    %3 = arith.index_cast %c0_i32 : i32 to index
    %c0_2 = arith.constant 0 : index
    %c0_3 = arith.constant 0 : index
    %4 = vector.load %arg1[%3, %c0_2, %c0_3] : memref<8x8x128xf32, #tpu.memory_space<vmem>>, vector<1x8x128xf32>
    %5 = vector.shape_cast %4 : vector<1x8x128xf32> to vector<8x128xf32>
    %cst_4 = arith.constant dense<0.000000e+00> : vector<8x128xf32>
    %6 = tpu.matmul %1, %0, %cst_4 {dimension_numbers = #tpu.dot_dimension_numbers<[1], [0], [0], [1], [0, 0, 1, 1], [], []>} : vector<8x32xf32>, vector<32x128xf32>, vector<8x128xf32> -> vector<8x128xf32>
    %7 = arith.addf %5, %6 : vector<8x128xf32>
    %8 = arith.negf %7 : vector<8x128xf32>
    %9 = math.exp %8 : vector<8x128xf32>
    %cst_5 = arith.constant 1.000000e+00 : f32
    %10 = vector.broadcast %cst_5 : f32 to vector<8x128xf32>
    %11 = arith.addf %10, %9 : vector<8x128xf32>
    %12 = arith.divf %10, %11 : vector<8x128xf32>
    %13 = vector.extract_strided_slice %7 {offsets = [0, 64], sizes = [8, 32], strides = [1, 1]} : vector<8x128xf32> to vector<8x32xf32>
    %14 = math.tanh %13 : vector<8x32xf32>
    %15 = vector.extract_strided_slice %12 {offsets = [0, 0], sizes = [8, 32], strides = [1, 1]} : vector<8x128xf32> to vector<8x32xf32>
    %16 = vector.extract_strided_slice %12 {offsets = [0, 32], sizes = [8, 32], strides = [1, 1]} : vector<8x128xf32> to vector<8x32xf32>
    %17 = vector.extract_strided_slice %12 {offsets = [0, 96], sizes = [8, 32], strides = [1, 1]} : vector<8x128xf32> to vector<8x32xf32>
    %18 = arith.mulf %16, %2 : vector<8x32xf32>
    %19 = arith.mulf %15, %14 : vector<8x32xf32>
    %20 = arith.addf %18, %19 : vector<8x32xf32>
    %21 = math.tanh %20 : vector<8x32xf32>
    %22 = arith.mulf %17, %21 : vector<8x32xf32>
    %23 = arith.index_cast %c0_i32 : i32 to index
    %c0_6 = arith.constant 0 : index
    %c0_7 = arith.constant 0 : index
    %24 = vector.load %arg5[%23, %c0_6, %c0_7] : memref<8x8x32xf32, #tpu.memory_space<vmem>>, vector<1x8x32xf32>
    %25 = vector.shape_cast %24 : vector<1x8x32xf32> to vector<8x32xf32>
    %26 = vector.shape_cast %22 : vector<8x32xf32> to vector<1x8x32xf32>
    tpu.vector_store %arg5[%23, %c0_6, %c0_7], %26 {strides = array<i32>} : memref<8x8x32xf32, #tpu.memory_space<vmem>>, vector<1x8x32xf32>,
    %c1_i32 = arith.constant 1 : i32
    %27 = arith.index_cast %c1_i32 : i32 to index
    %c0_8 = arith.constant 0 : index
    %c0_9 = arith.constant 0 : index
    %28 = vector.load %arg1[%27, %c0_8, %c0_9] : memref<8x8x128xf32, #tpu.memory_space<vmem>>, vector<1x8x128xf32>
    %29 = vector.shape_cast %28 : vector<1x8x128xf32> to vector<8x128xf32>
    %cst_10 = arith.constant dense<0.000000e+00> : vector<8x128xf32>
    %30 = tpu.matmul %22, %0, %cst_10 {dimension_numbers = #tpu.dot_dimension_numbers<[1], [0], [0], [1], [0, 0, 1, 1], [], []>} : vector<8x32xf32>, vector<32x128xf32>, vector<8x128xf32> -> vector<8x128xf32>
    %31 = arith.addf %29, %30 : vector<8x128xf32>
    %32 = arith.negf %31 : vector<8x128xf32>
    %33 = math.exp %32 : vector<8x128xf32>
    %cst_11 = arith.constant 1.000000e+00 : f32
    %34 = vector.broadcast %cst_11 : f32 to vector<8x128xf32>
    %35 = arith.addf %34, %33 : vector<8x128xf32>
    %36 = arith.divf %34, %35 : vector<8x128xf32>
    %37 = vector.extract_strided_slice %31 {offsets = [0, 64], sizes = [8, 32], strides = [1, 1]} : vector<8x128xf32> to vector<8x32xf32>
    %38 = math.tanh %37 : vector<8x32xf32>
    %39 = vector.extract_strided_slice %36 {offsets = [0, 0], sizes = [8, 32], strides = [1, 1]} : vector<8x128xf32> to vector<8x32xf32>
    %40 = vector.extract_strided_slice %36 {offsets = [0, 32], sizes = [8, 32], strides = [1, 1]} : vector<8x128xf32> to vector<8x32xf32>
    %41 = vector.extract_strided_slice %36 {offsets = [0, 96], sizes = [8, 32], strides = [1, 1]} : vector<8x128xf32> to vector<8x32xf32>
    %42 = arith.mulf %40, %20 : vector<8x32xf32>
    %43 = arith.mulf %39, %38 : vector<8x32xf32>
    %44 = arith.addf %42, %43 : vector<8x32xf32>
    %45 = math.tanh %44 : vector<8x32xf32>
    %46 = arith.mulf %41, %45 : vector<8x32xf32>
    %47 = arith.index_cast %c1_i32 : i32 to index
    %c0_12 = arith.constant 0 : index
    %c0_13 = arith.constant 0 : index
    %48 = vector.load %arg5[%47, %c0_12, %c0_13] : memref<8x8x32xf32, #tpu.memory_space<vmem>>, vector<1x8x32xf32>
    %49 = vector.shape_cast %48 : vector<1x8x32xf32> to vector<8x32xf32>
    %50 = vector.shape_cast %46 : vector<8x32xf32> to vector<1x8x32xf32>
    tpu.vector_store %arg5[%47, %c0_12, %c0_13], %50 {strides = array<i32>} : memref<8x8x32xf32, #tpu.memory_space<vmem>>, vector<1x8x32xf32>,
    %c2_i32 = arith.constant 2 : i32
    %51 = arith.index_cast %c2_i32 : i32 to index
    %c0_14 = arith.constant 0 : index
    %c0_15 = arith.constant 0 : index
    %52 = vector.load %arg1[%51, %c0_14, %c0_15] : memref<8x8x128xf32, #tpu.memory_space<vmem>>, vector<1x8x128xf32>
    %53 = vector.shape_cast %52 : vector<1x8x128xf32> to vector<8x128xf32>
    %cst_16 = arith.constant dense<0.000000e+00> : vector<8x128xf32>
    %54 = tpu.matmul %46, %0, %cst_16 {dimension_numbers = #tpu.dot_dimension_numbers<[1], [0], [0], [1], [0, 0, 1, 1], [], []>} : vector<8x32xf32>, vector<32x128xf32>, vector<8x128xf32> -> vector<8x128xf32>
    %55 = arith.addf %53, %54 : vector<8x128xf32>
    %56 = arith.negf %55 : vector<8x128xf32>
    %57 = math.exp %56 : vector<8x128xf32>
    %cst_17 = arith.constant 1.000000e+00 : f32
    %58 = vector.broadcast %cst_17 : f32 to vector<8x128xf32>
    %59 = arith.addf %58, %57 : vector<8x128xf32>
    %60 = arith.divf %58, %59 : vector<8x128xf32>
    %61 = vector.extract_strided_slice %55 {offsets = [0, 64], sizes = [8, 32], strides = [1, 1]} : vector<8x128xf32> to vector<8x32xf32>
    %62 = math.tanh %61 : vector<8x32xf32>
    %63 = vector.extract_strided_slice %60 {offsets = [0, 0], sizes = [8, 32], strides = [1, 1]} : vector<8x128xf32> to vector<8x32xf32>
    %64 = vector.extract_strided_slice %60 {offsets = [0, 32], sizes = [8, 32], strides = [1, 1]} : vector<8x128xf32> to vector<8x32xf32>
    %65 = vector.extract_strided_slice %60 {offsets = [0, 96], sizes = [8, 32], strides = [1, 1]} : vector<8x128xf32> to vector<8x32xf32>
    %66 = arith.mulf %64, %44 : vector<8x32xf32>
    %67 = arith.mulf %63, %62 : vector<8x32xf32>
    %68 = arith.addf %66, %67 : vector<8x32xf32>
    %69 = math.tanh %68 : vector<8x32xf32>
    %70 = arith.mulf %65, %69 : vector<8x32xf32>
    %71 = arith.index_cast %c2_i32 : i32 to index
    %c0_18 = arith.constant 0 : index
    %c0_19 = arith.constant 0 : index
    %72 = vector.load %arg5[%71, %c0_18, %c0_19] : memref<8x8x32xf32, #tpu.memory_space<vmem>>, vector<1x8x32xf32>
    %73 = vector.shape_cast %72 : vector<1x8x32xf32> to vector<8x32xf32>
    %74 = vector.shape_cast %70 : vector<8x32xf32> to vector<1x8x32xf32>
    tpu.vector_store %arg5[%71, %c0_18, %c0_19], %74 {strides = array<i32>} : memref<8x8x32xf32, #tpu.memory_space<vmem>>, vector<1x8x32xf32>,
    %c3_i32 = arith.constant 3 : i32
    %75 = arith.index_cast %c3_i32 : i32 to index
    %c0_20 = arith.constant 0 : index
    %c0_21 = arith.constant 0 : index
    %76 = vector.load %arg1[%75, %c0_20, %c0_21] : memref<8x8x128xf32, #tpu.memory_space<vmem>>, vector<1x8x128xf32>
    %77 = vector.shape_cast %76 : vector<1x8x128xf32> to vector<8x128xf32>
    %cst_22 = arith.constant dense<0.000000e+00> : vector<8x128xf32>
    %78 = tpu.matmul %70, %0, %cst_22 {dimension_numbers = #tpu.dot_dimension_numbers<[1], [0], [0], [1], [0, 0, 1, 1], [], []>} : vector<8x32xf32>, vector<32x128xf32>, vector<8x128xf32> -> vector<8x128xf32>
    %79 = arith.addf %77, %78 : vector<8x128xf32>
    %80 = arith.negf %79 : vector<8x128xf32>
    %81 = math.exp %80 : vector<8x128xf32>
    %cst_23 = arith.constant 1.000000e+00 : f32
    %82 = vector.broadcast %cst_23 : f32 to vector<8x128xf32>
    %83 = arith.addf %82, %81 : vector<8x128xf32>
    %84 = arith.divf %82, %83 : vector<8x128xf32>
    %85 = vector.extract_strided_slice %79 {offsets = [0, 64], sizes = [8, 32], strides = [1, 1]} : vector<8x128xf32> to vector<8x32xf32>
    %86 = math.tanh %85 : vector<8x32xf32>
    %87 = vector.extract_strided_slice %84 {offsets = [0, 0], sizes = [8, 32], strides = [1, 1]} : vector<8x128xf32> to vector<8x32xf32>
    %88 = vector.extract_strided_slice %84 {offsets = [0, 32], sizes = [8, 32], strides = [1, 1]} : vector<8x128xf32> to vector<8x32xf32>
    %89 = vector.extract_strided_slice %84 {offsets = [0, 96], sizes = [8, 32], strides = [1, 1]} : vector<8x128xf32> to vector<8x32xf32>
    %90 = arith.mulf %88, %68 : vector<8x32xf32>
    %91 = arith.mulf %87, %86 : vector<8x32xf32>
    %92 = arith.addf %90, %91 : vector<8x32xf32>
    %93 = math.tanh %92 : vector<8x32xf32>
    %94 = arith.mulf %89, %93 : vector<8x32xf32>
    %95 = arith.index_cast %c3_i32 : i32 to index
    %c0_24 = arith.constant 0 : index
    %c0_25 = arith.constant 0 : index
    %96 = vector.load %arg5[%95, %c0_24, %c0_25] : memref<8x8x32xf32, #tpu.memory_space<vmem>>, vector<1x8x32xf32>
    %97 = vector.shape_cast %96 : vector<1x8x32xf32> to vector<8x32xf32>
    %98 = vector.shape_cast %94 : vector<8x32xf32> to vector<1x8x32xf32>
    tpu.vector_store %arg5[%95, %c0_24, %c0_25], %98 {strides = array<i32>} : memref<8x8x32xf32, #tpu.memory_space<vmem>>, vector<1x8x32xf32>,
    %c4_i32 = arith.constant 4 : i32
    %99 = arith.index_cast %c4_i32 : i32 to index
    %c0_26 = arith.constant 0 : index
    %c0_27 = arith.constant 0 : index
    %100 = vector.load %arg1[%99, %c0_26, %c0_27] : memref<8x8x128xf32, #tpu.memory_space<vmem>>, vector<1x8x128xf32>
    %101 = vector.shape_cast %100 : vector<1x8x128xf32> to vector<8x128xf32>
    %cst_28 = arith.constant dense<0.000000e+00> : vector<8x128xf32>
    %102 = tpu.matmul %94, %0, %cst_28 {dimension_numbers = #tpu.dot_dimension_numbers<[1], [0], [0], [1], [0, 0, 1, 1], [], []>} : vector<8x32xf32>, vector<32x128xf32>, vector<8x128xf32> -> vector<8x128xf32>
    %103 = arith.addf %101, %102 : vector<8x128xf32>
    %104 = arith.negf %103 : vector<8x128xf32>
    %105 = math.exp %104 : vector<8x128xf32>
    %cst_29 = arith.constant 1.000000e+00 : f32
    %106 = vector.broadcast %cst_29 : f32 to vector<8x128xf32>
    %107 = arith.addf %106, %105 : vector<8x128xf32>
    %108 = arith.divf %106, %107 : vector<8x128xf32>
    %109 = vector.extract_strided_slice %103 {offsets = [0, 64], sizes = [8, 32], strides = [1, 1]} : vector<8x128xf32> to vector<8x32xf32>
    %110 = math.tanh %109 : vector<8x32xf32>
    %111 = vector.extract_strided_slice %108 {offsets = [0, 0], sizes = [8, 32], strides = [1, 1]} : vector<8x128xf32> to vector<8x32xf32>
    %112 = vector.extract_strided_slice %108 {offsets = [0, 32], sizes = [8, 32], strides = [1, 1]} : vector<8x128xf32> to vector<8x32xf32>
    %113 = vector.extract_strided_slice %108 {offsets = [0, 96], sizes = [8, 32], strides = [1, 1]} : vector<8x128xf32> to vector<8x32xf32>
    %114 = arith.mulf %112, %92 : vector<8x32xf32>
    %115 = arith.mulf %111, %110 : vector<8x32xf32>
    %116 = arith.addf %114, %115 : vector<8x32xf32>
    %117 = math.tanh %116 : vector<8x32xf32>
    %118 = arith.mulf %113, %117 : vector<8x32xf32>
    %119 = arith.index_cast %c4_i32 : i32 to index
    %c0_30 = arith.constant 0 : index
    %c0_31 = arith.constant 0 : index
    %120 = vector.load %arg5[%119, %c0_30, %c0_31] : memref<8x8x32xf32, #tpu.memory_space<vmem>>, vector<1x8x32xf32>
    %121 = vector.shape_cast %120 : vector<1x8x32xf32> to vector<8x32xf32>
    %122 = vector.shape_cast %118 : vector<8x32xf32> to vector<1x8x32xf32>
    tpu.vector_store %arg5[%119, %c0_30, %c0_31], %122 {strides = array<i32>} : memref<8x8x32xf32, #tpu.memory_space<vmem>>, vector<1x8x32xf32>,
    %c5_i32 = arith.constant 5 : i32
    %123 = arith.index_cast %c5_i32 : i32 to index
    %c0_32 = arith.constant 0 : index
    %c0_33 = arith.constant 0 : index
    %124 = vector.load %arg1[%123, %c0_32, %c0_33] : memref<8x8x128xf32, #tpu.memory_space<vmem>>, vector<1x8x128xf32>
    %125 = vector.shape_cast %124 : vector<1x8x128xf32> to vector<8x128xf32>
    %cst_34 = arith.constant dense<0.000000e+00> : vector<8x128xf32>
    %126 = tpu.matmul %118, %0, %cst_34 {dimension_numbers = #tpu.dot_dimension_numbers<[1], [0], [0], [1], [0, 0, 1, 1], [], []>} : vector<8x32xf32>, vector<32x128xf32>, vector<8x128xf32> -> vector<8x128xf32>
    %127 = arith.addf %125, %126 : vector<8x128xf32>
    %128 = arith.negf %127 : vector<8x128xf32>
    %129 = math.exp %128 : vector<8x128xf32>
    %cst_35 = arith.constant 1.000000e+00 : f32
    %130 = vector.broadcast %cst_35 : f32 to vector<8x128xf32>
    %131 = arith.addf %130, %129 : vector<8x128xf32>
    %132 = arith.divf %130, %131 : vector<8x128xf32>
    %133 = vector.extract_strided_slice %127 {offsets = [0, 64], sizes = [8, 32], strides = [1, 1]} : vector<8x128xf32> to vector<8x32xf32>
    %134 = math.tanh %133 : vector<8x32xf32>
    %135 = vector.extract_strided_slice %132 {offsets = [0, 0], sizes = [8, 32], strides = [1, 1]} : vector<8x128xf32> to vector<8x32xf32>
    %136 = vector.extract_strided_slice %132 {offsets = [0, 32], sizes = [8, 32], strides = [1, 1]} : vector<8x128xf32> to vector<8x32xf32>
    %137 = vector.extract_strided_slice %132 {offsets = [0, 96], sizes = [8, 32], strides = [1, 1]} : vector<8x128xf32> to vector<8x32xf32>
    %138 = arith.mulf %136, %116 : vector<8x32xf32>
    %139 = arith.mulf %135, %134 : vector<8x32xf32>
    %140 = arith.addf %138, %139 : vector<8x32xf32>
    %141 = math.tanh %140 : vector<8x32xf32>
    %142 = arith.mulf %137, %141 : vector<8x32xf32>
    %143 = arith.index_cast %c5_i32 : i32 to index
    %c0_36 = arith.constant 0 : index
    %c0_37 = arith.constant 0 : index
    %144 = vector.load %arg5[%143, %c0_36, %c0_37] : memref<8x8x32xf32, #tpu.memory_space<vmem>>, vector<1x8x32xf32>
    %145 = vector.shape_cast %144 : vector<1x8x32xf32> to vector<8x32xf32>
    %146 = vector.shape_cast %142 : vector<8x32xf32> to vector<1x8x32xf32>
    tpu.vector_store %arg5[%143, %c0_36, %c0_37], %146 {strides = array<i32>} : memref<8x8x32xf32, #tpu.memory_space<vmem>>, vector<1x8x32xf32>,
    %c6_i32 = arith.constant 6 : i32
    %147 = arith.index_cast %c6_i32 : i32 to index
    %c0_38 = arith.constant 0 : index
    %c0_39 = arith.constant 0 : index
    %148 = vector.load %arg1[%147, %c0_38, %c0_39] : memref<8x8x128xf32, #tpu.memory_space<vmem>>, vector<1x8x128xf32>
    %149 = vector.shape_cast %148 : vector<1x8x128xf32> to vector<8x128xf32>
    %cst_40 = arith.constant dense<0.000000e+00> : vector<8x128xf32>
    %150 = tpu.matmul %142, %0, %cst_40 {dimension_numbers = #tpu.dot_dimension_numbers<[1], [0], [0], [1], [0, 0, 1, 1], [], []>} : vector<8x32xf32>, vector<32x128xf32>, vector<8x128xf32> -> vector<8x128xf32>
    %151 = arith.addf %149, %150 : vector<8x128xf32>
    %152 = arith.negf %151 : vector<8x128xf32>
    %153 = math.exp %152 : vector<8x128xf32>
    %cst_41 = arith.constant 1.000000e+00 : f32
    %154 = vector.broadcast %cst_41 : f32 to vector<8x128xf32>
    %155 = arith.addf %154, %153 : vector<8x128xf32>
    %156 = arith.divf %154, %155 : vector<8x128xf32>
    %157 = vector.extract_strided_slice %151 {offsets = [0, 64], sizes = [8, 32], strides = [1, 1]} : vector<8x128xf32> to vector<8x32xf32>
    %158 = math.tanh %157 : vector<8x32xf32>
    %159 = vector.extract_strided_slice %156 {offsets = [0, 0], sizes = [8, 32], strides = [1, 1]} : vector<8x128xf32> to vector<8x32xf32>
    %160 = vector.extract_strided_slice %156 {offsets = [0, 32], sizes = [8, 32], strides = [1, 1]} : vector<8x128xf32> to vector<8x32xf32>
    %161 = vector.extract_strided_slice %156 {offsets = [0, 96], sizes = [8, 32], strides = [1, 1]} : vector<8x128xf32> to vector<8x32xf32>
    %162 = arith.mulf %160, %140 : vector<8x32xf32>
    %163 = arith.mulf %159, %158 : vector<8x32xf32>
    %164 = arith.addf %162, %163 : vector<8x32xf32>
    %165 = math.tanh %164 : vector<8x32xf32>
    %166 = arith.mulf %161, %165 : vector<8x32xf32>
    %167 = arith.index_cast %c6_i32 : i32 to index
    %c0_42 = arith.constant 0 : index
    %c0_43 = arith.constant 0 : index
    %168 = vector.load %arg5[%167, %c0_42, %c0_43] : memref<8x8x32xf32, #tpu.memory_space<vmem>>, vector<1x8x32xf32>
    %169 = vector.shape_cast %168 : vector<1x8x32xf32> to vector<8x32xf32>
    %170 = vector.shape_cast %166 : vector<8x32xf32> to vector<1x8x32xf32>
    tpu.vector_store %arg5[%167, %c0_42, %c0_43], %170 {strides = array<i32>} : memref<8x8x32xf32, #tpu.memory_space<vmem>>, vector<1x8x32xf32>,
    %c7_i32 = arith.constant 7 : i32
    %171 = arith.index_cast %c7_i32 : i32 to index
    %c0_44 = arith.constant 0 : index
    %c0_45 = arith.constant 0 : index
    %172 = vector.load %arg1[%171, %c0_44, %c0_45] : memref<8x8x128xf32, #tpu.memory_space<vmem>>, vector<1x8x128xf32>
    %173 = vector.shape_cast %172 : vector<1x8x128xf32> to vector<8x128xf32>
    %cst_46 = arith.constant dense<0.000000e+00> : vector<8x128xf32>
    %174 = tpu.matmul %166, %0, %cst_46 {dimension_numbers = #tpu.dot_dimension_numbers<[1], [0], [0], [1], [0, 0, 1, 1], [], []>} : vector<8x32xf32>, vector<32x128xf32>, vector<8x128xf32> -> vector<8x128xf32>
    %175 = arith.addf %173, %174 : vector<8x128xf32>
    %176 = arith.negf %175 : vector<8x128xf32>
    %177 = math.exp %176 : vector<8x128xf32>
    %cst_47 = arith.constant 1.000000e+00 : f32
    %178 = vector.broadcast %cst_47 : f32 to vector<8x128xf32>
    %179 = arith.addf %178, %177 : vector<8x128xf32>
    %180 = arith.divf %178, %179 : vector<8x128xf32>
    %181 = vector.extract_strided_slice %175 {offsets = [0, 64], sizes = [8, 32], strides = [1, 1]} : vector<8x128xf32> to vector<8x32xf32>
    %182 = math.tanh %181 : vector<8x32xf32>
    %183 = vector.extract_strided_slice %180 {offsets = [0, 0], sizes = [8, 32], strides = [1, 1]} : vector<8x128xf32> to vector<8x32xf32>
    %184 = vector.extract_strided_slice %180 {offsets = [0, 32], sizes = [8, 32], strides = [1, 1]} : vector<8x128xf32> to vector<8x32xf32>
    %185 = vector.extract_strided_slice %180 {offsets = [0, 96], sizes = [8, 32], strides = [1, 1]} : vector<8x128xf32> to vector<8x32xf32>
    %186 = arith.mulf %184, %164 : vector<8x32xf32>
    %187 = arith.mulf %183, %182 : vector<8x32xf32>
    %188 = arith.addf %186, %187 : vector<8x32xf32>
    %189 = math.tanh %188 : vector<8x32xf32>
    %190 = arith.mulf %185, %189 : vector<8x32xf32>
    %191 = arith.index_cast %c7_i32 : i32 to index
    %c0_48 = arith.constant 0 : index
    %c0_49 = arith.constant 0 : index
    %192 = vector.load %arg5[%191, %c0_48, %c0_49] : memref<8x8x32xf32, #tpu.memory_space<vmem>>, vector<1x8x32xf32>
    %193 = vector.shape_cast %192 : vector<1x8x32xf32> to vector<8x32xf32>
    %194 = vector.shape_cast %190 : vector<8x32xf32> to vector<1x8x32xf32>
    tpu.vector_store %arg5[%191, %c0_48, %c0_49], %194 {strides = array<i32>} : memref<8x8x32xf32, #tpu.memory_space<vmem>>, vector<1x8x32xf32>,
    %c8_i32 = arith.constant 8 : i32
    %c0_50 = arith.constant 0 : index
    %c0_51 = arith.constant 0 : index
    %195 = vector.load %arg3[%c0_50, %c0_51] : memref<32x4xf32, #tpu.memory_space<vmem>>, vector<32x4xf32>
    %cst_52 = arith.constant dense<0.000000e+00> : vector<8x4xf32>
    %196 = tpu.matmul %190, %195, %cst_52 {dimension_numbers = #tpu.dot_dimension_numbers<[1], [0], [0], [1], [0, 0, 1, 1], [], []>} : vector<8x32xf32>, vector<32x4xf32>, vector<8x4xf32> -> vector<8x4xf32>
    %c0_53 = arith.constant 0 : index
    %c0_54 = arith.constant 0 : index
    %197 = vector.load %arg4[%c0_53, %c0_54] : memref<1x4xf32, #tpu.memory_space<vmem>>, vector<1x4xf32>
    %198 = vector.broadcast %197 : vector<1x4xf32> to vector<8x4xf32>
    %199 = arith.addf %196, %198 : vector<8x4xf32>
    %c0_55 = arith.constant 0 : index
    %c0_56 = arith.constant 0 : index
    %200 = vector.load %arg6[%c0_55, %c0_56] : memref<8x4xf32, #tpu.memory_space<vmem>>, vector<8x4xf32>
    tpu.vector_store %arg6[%c0_55, %c0_56], %199 {strides = array<i32>} : memref<8x4xf32, #tpu.memory_space<vmem>>, vector<8x4xf32>,
    return
  }
  func.func @transform_0(%arg0: i32) -> (i32, i32, i32) {
    %c0_i32 = arith.constant 0 : i32
    %c0_i32_0 = arith.constant 0 : i32
    %c0_i32_1 = arith.constant 0 : i32
    return %c0_i32, %arg0, %c0_i32_0 : i32, i32, i32
  }
  func.func @transform_1(%arg0: i32) -> (i32, i32) {
    %c0_i32 = arith.constant 0 : i32
    %c0_i32_0 = arith.constant 0 : i32
    %c0_i32_1 = arith.constant 0 : i32
    return %c0_i32, %c0_i32_0 : i32, i32
  }
  func.func @transform_2(%arg0: i32) -> (i32, i32) {
    %c0_i32 = arith.constant 0 : i32
    %c0_i32_0 = arith.constant 0 : i32
    %c0_i32_1 = arith.constant 0 : i32
    return %c0_i32, %c0_i32_0 : i32, i32
  }
  func.func @transform_3(%arg0: i32) -> (i32, i32) {
    %c0_i32 = arith.constant 0 : i32
    %c0_i32_0 = arith.constant 0 : i32
    %c0_i32_1 = arith.constant 0 : i32
    return %c0_i32, %c0_i32_0 : i32, i32
  }
  func.func @transform_4(%arg0: i32) -> (i32, i32, i32) {
    %c0_i32 = arith.constant 0 : i32
    %c0_i32_0 = arith.constant 0 : i32
    %c0_i32_1 = arith.constant 0 : i32
    return %c0_i32, %arg0, %c0_i32_0 : i32, i32, i32
  }
  func.func @transform_5(%arg0: i32) -> (i32, i32) {
    %c0_i32 = arith.constant 0 : i32
    %c0_i32_0 = arith.constant 0 : i32
    return %arg0, %c0_i32 : i32, i32
  }
}

</mosaic_0001>

<llo_original>
// kernel: tpu_custom_call.1
$region0: #{tpu_custom_call.1}
  #allocation0 [shape = 'u32[]', space=smem, size = 0x4, offset = 0x4, fixed_abs, tag = 'smem constant byte address 0x4 - core index']
  #allocation1 [shape = 'u32[72,128]{1,0:T(1,128)}', space=vmem, size = 0x9000, scoped, tag = 'internal scratch']
  %s0 = inlined_call_operand.hbm [shape: f32[8,8,128], index: 0, kind: input, shape index: {}]
  %s1 = inlined_call_operand.vmem [shape: f32[32,128], index: 1, kind: input, shape index: {}]
  %s2 = inlined_call_operand.vmem [shape: f32[32,4], index: 2, kind: input, shape index: {}]
  %s3 = inlined_call_operand.vmem [shape: f32[1,4], index: 3, kind: input, shape index: {}]
  %s4 = inlined_call_operand.hbm [shape: f32[8,8,32], index: 4, kind: output, shape index: {0}]
  %s5 = inlined_call_operand.vmem [shape: f32[8,4], index: 5, kind: output, shape index: {1}]
  %6 = xla_tuple %s4, %s5
  %s7 = sld [smem:[#allocation0]]
  $region38: #{tpu_custom_call.1} parent=0
    _
  %s9 = ssub.s32 1, %s7
  %s10 = scalar_select 0, %s9, %s7
  $region1: #{tpu_custom_call.1} parent=0
    #allocation2 [shape = 'u8[32768]{0}', space=vmem, size = 0x8000, scoped, tag = 'input window, operand 0, single buffered']
    #allocation3 [shape = 's32[1]{0}', space=sflag, size = 0x4, scoped, tag = 'scoped memory for tpu_custom_call.1']
    #allocation4 [shape = 's32[1]{0}', space=sflag, size = 0x4, scoped, tag = 'scoped memory for tpu_custom_call.1']
    #allocation5 [shape = 'u8[32768]{0}', space=vmem, size = 0x8000, scoped, tag = 'output window, operand 0, single buffered']
    %11 = vsyncpa [#allocation3], 0
    %12 = vsyncpa [#allocation4], 0
    // Predicated region
    $region2: #{tpu_custom_call.1} parent=1 // pred_check
      _
    $region3: #{tpu_custom_call.1} parent=1 // pred_check_branch
      %14 = sbr.rel (0) target = $region5
    $region4: #{tpu_custom_call.1} parent=1 // pred_region
      %16 = vsyncadd [#allocation3], 0
      %s17 = sshll.u32 %s0, 4
      %s18 = int_to_ptr.hbm [resolvable:$true] %s17
      %s19 = sshll.u32 [#allocation2], 4
      %s20 = int_to_ptr.vmem [resolvable:$true] %s19
      %25 = dma.hbm_to_vmem [thread:$0]  %s18, 1024, %s20, [#allocation3], 128, 128, 8
    $region5: #{tpu_custom_call.1} parent=1 // pred_fallthru
      _
    // Predicated region
    $region6: #{tpu_custom_call.1} parent=1 // pred_check
      _
    $region7: #{tpu_custom_call.1} parent=1 // pred_check_branch
      %27 = sbr.rel (0) target = $region9
    $region8: #{tpu_custom_call.1} parent=1 // pred_region
      _
    $region9: #{tpu_custom_call.1} parent=1 // pred_fallthru
      _
    // Predicated region
    $region10: #{tpu_custom_call.1} parent=1 // pred_check
      _
    $region11: #{tpu_custom_call.1} parent=1 // pred_check_branch
      %29 = sbr.rel (0) target = $region13
    $region12: #{tpu_custom_call.1} parent=1 // pred_region
      _
    $region13: #{tpu_custom_call.1} parent=1 // pred_fallthru
      _
    // Predicated region
    $region14: #{tpu_custom_call.1} parent=1 // pred_check
      _
    $region15: #{tpu_custom_call.1} parent=1 // pred_check_branch
      %31 = sbr.rel (0) target = $region17
    $region16: #{tpu_custom_call.1} parent=1 // pred_region
      _
    $region17: #{tpu_custom_call.1} parent=1 // pred_fallthru
      _
    // Predicated region
    $region18: #{tpu_custom_call.1} parent=1 // pred_check
      _
    $region19: #{tpu_custom_call.1} parent=1 // pred_check_branch
      %33 = sbr.rel (0) target = $region21
    $region20: #{tpu_custom_call.1} parent=1 // pred_region
      %35 = dma.done [#allocation3], 1024
    $region21: #{tpu_custom_call.1} parent=1 // pred_fallthru
      _
    %v36 = vld [vmem:[%s1] sm:$0xff]
    %v37 = vld [vmem:[%s1 + $0x8] sm:$0xff]
    %v38 = vld [vmem:[%s1 + $0x10] sm:$0xff]
    %v39 = vld [vmem:[%s1 + $0x18] sm:$0xff]
    %v40 = vld [vmem:[#allocation2] sm:$0xff]
    %vm41 = vcmask 261120
    %v43 = vsel %vm41, 0.0, 0
    %45 = vmatpush.msra.mxu0 0.0
    %46 = vmatpush.msra.mxu0 0.0
    %47 = vmatpush.msra.mxu0 0.0
    %48 = vmatpush.msra.mxu0 0.0
    %49 = vmatpush.msra.mxu0 0.0
    %50 = vmatpush.msra.mxu0 0.0
    %51 = vmatpush.msra.mxu0 0.0
    %52 = vmatpush.msra.mxu0 0.0
    %53 = vmatpush.msra.mxu0 0.0
    %54 = vmatpush.msra.mxu0 0.0
    %55 = vmatpush.msra.mxu0 0.0
    %56 = vmatpush.msra.mxu0 0.0
    %57 = vmatpush.msra.mxu0 %v39
    %58 = vmatpush.msra.mxu0 %v38
    %59 = vmatpush.msra.mxu0 %v37
    %60 = vmatpush.msra.mxu0 %v36
    %61 = vmatmul.f32.gmra.mxu0 %v43
    %v62 = vpop.f32.mrf.mxu0
    %v63 = vadd.f32 0.0, %v62
    %64 = vdwg.mxu0
    %v65 = vadd.f32 %v40, %v63
    %v66 = vxor.u32 %v65, 2147483648
    %v67 = vmul.f32 %v66, 1.442695
    %v68 = vpow.pop %v67
    %v69 = vadd.f32 %v68, 1.0
    %v70 = vrcp.pop %v69
    %v71 = vmul.f32 %v69, %v70
    %v72 = vsub.f32 1.0, %v71
    %v73 = vmul.f32 %v70, %v72
    %v74 = vadd.f32 %v70, %v73
    %vm75 = vweird.f32 %v69
    %vm76 = vweird.f32 %v70
    %vm77 = vmor %vm75, %vm76
    %v78 = vsel %vm77, %v70, %v74
    %v79 = vand.u32 2147483647, %v69
    %vm80 = vcmp.eq.f32.partialorder %v79, 8.507059e+37
    %v81 = vand.u32 %v69, 2147483648
    %v82 = vor.u32 1.1754944e-38, %v81
    %v83 = vsel %vm80, %v82, %v78
    %v84 = vmul.f32 1.0, %v83
    %v85 = vtanh.pop %v65
    %v86 = vmul.f32 %v84, 0.0
    %88 = vrot.lane.b32.xlu0 %v85, 64
    %v89 = vpop.permute.xlu0 %88
    %v91 = vmul.f32 %v84, %v89
    %93 = vrot.lane.b32.xlu0 %v91, 32
    %v94 = vpop.permute.xlu0 %93
    %v96 = vadd.f32 %v86, %v94
    %v97 = vtanh.pop %v96
    %99 = vrot.lane.b32.xlu0 %v97, 64
    %v100 = vpop.permute.xlu0 %99
    %v102 = vmul.f32 %v84, %v100
    %104 = vrot.lane.b32.xlu0 %v102, 32
    %v105 = vpop.permute.xlu0 %104
    %107 = vst.msk [vmem:[#allocation5] sm:$0xff] %vm41, %v105
    %s108 = scalar_lea.vmem [#allocation2], 8
    %v109 = vld [vmem:[%s108] sm:$0xff]
    %v110 = vsel %vm41, %v105, 0
    %112 = vmatpush.msra.mxu0 0.0
    %113 = vmatpush.msra.mxu0 0.0
    %114 = vmatpush.msra.mxu0 0.0
    %115 = vmatpush.msra.mxu0 0.0
    %116 = vmatpush.msra.mxu0 0.0
    %117 = vmatpush.msra.mxu0 0.0
    %118 = vmatpush.msra.mxu0 0.0
    %119 = vmatpush.msra.mxu0 0.0
    %120 = vmatpush.msra.mxu0 0.0
    %121 = vmatpush.msra.mxu0 0.0
    %122 = vmatpush.msra.mxu0 0.0
    %123 = vmatpush.msra.mxu0 0.0
    %124 = vmatpush.msra.mxu0 %v39
    %125 = vmatpush.msra.mxu0 %v38
    %126 = vmatpush.msra.mxu0 %v37
    %127 = vmatpush.msra.mxu0 %v36
    %128 = vmatmul.f32.gmra.mxu0 %v110
    %v129 = vpop.f32.mrf.mxu0
    %v130 = vadd.f32 0.0, %v129
    %131 = vdwg.mxu0
    %v132 = vadd.f32 %v109, %v130
    %v133 = vxor.u32 %v132, 2147483648
    %v134 = vmul.f32 %v133, 1.442695
    %v135 = vpow.pop %v134
    %v136 = vadd.f32 %v135, 1.0
    %v137 = vrcp.pop %v136
    %v138 = vmul.f32 %v136, %v137
    %v139 = vsub.f32 1.0, %v138
    %v140 = vmul.f32 %v137, %v139
    %v141 = vadd.f32 %v137, %v140
    %vm142 = vweird.f32 %v136
    %vm143 = vweird.f32 %v137
    %vm144 = vmor %vm142, %vm143
    %v145 = vsel %vm144, %v137, %v141
    %v146 = vand.u32 2147483647, %v136
    %vm147 = vcmp.eq.f32.partialorder %v146, 8.507059e+37
    %v148 = vand.u32 %v136, 2147483648
    %v149 = vor.u32 1.1754944e-38, %v148
    %v150 = vsel %vm147, %v149, %v145
    %v151 = vmul.f32 1.0, %v150
    %v152 = vtanh.pop %v132
    %v153 = vmul.f32 %v151, %v96
    %155 = vrot.lane.b32.xlu0 %v152, 64
    %v156 = vpop.permute.xlu0 %155
    %v158 = vmul.f32 %v151, %v156
    %160 = vrot.lane.b32.xlu0 %v158, 32
    %v161 = vpop.permute.xlu0 %160
    %v163 = vadd.f32 %v153, %v161
    %v164 = vtanh.pop %v163
    %166 = vrot.lane.b32.xlu0 %v164, 64
    %v167 = vpop.permute.xlu0 %166
    %v169 = vmul.f32 %v151, %v167
    %171 = vrot.lane.b32.xlu0 %v169, 32
    %v172 = vpop.permute.xlu0 %171
    %s174 = scalar_lea.vmem [#allocation5], 8
    %175 = vst.msk [vmem:[%s174] sm:$0xff] %vm41, %v172
    %s176 = scalar_lea.vmem [#allocation2], 16
    %v177 = vld [vmem:[%s176] sm:$0xff]
    %v178 = vsel %vm41, %v172, 0
    %180 = vmatpush.msra.mxu0 0.0
    %181 = vmatpush.msra.mxu0 0.0
    %182 = vmatpush.msra.mxu0 0.0
    %183 = vmatpush.msra.mxu0 0.0
    %184 = vmatpush.msra.mxu0 0.0
    %185 = vmatpush.msra.mxu0 0.0
    %186 = vmatpush.msra.mxu0 0.0
    %187 = vmatpush.msra.mxu0 0.0
    %188 = vmatpush.msra.mxu0 0.0
    %189 = vmatpush.msra.mxu0 0.0
    %190 = vmatpush.msra.mxu0 0.0
    %191 = vmatpush.msra.mxu0 0.0
    %192 = vmatpush.msra.mxu0 %v39
    %193 = vmatpush.msra.mxu0 %v38
    %194 = vmatpush.msra.mxu0 %v37
    %195 = vmatpush.msra.mxu0 %v36
    %196 = vmatmul.f32.gmra.mxu0 %v178
    %v197 = vpop.f32.mrf.mxu0
    %v198 = vadd.f32 0.0, %v197
    %199 = vdwg.mxu0
    %v200 = vadd.f32 %v177, %v198
    %v201 = vxor.u32 %v200, 2147483648
    %v202 = vmul.f32 %v201, 1.442695
    %v203 = vpow.pop %v202
    %v204 = vadd.f32 %v203, 1.0
    %v205 = vrcp.pop %v204
    %v206 = vmul.f32 %v204, %v205
    %v207 = vsub.f32 1.0, %v206
    %v208 = vmul.f32 %v205, %v207
    %v209 = vadd.f32 %v205, %v208
    %vm210 = vweird.f32 %v204
    %vm211 = vweird.f32 %v205
    %vm212 = vmor %vm210, %vm211
    %v213 = vsel %vm212, %v205, %v209
    %v214 = vand.u32 2147483647, %v204
    %vm215 = vcmp.eq.f32.partialorder %v214, 8.507059e+37
    %v216 = vand.u32 %v204, 2147483648
    %v217 = vor.u32 1.1754944e-38, %v216
    %v218 = vsel %vm215, %v217, %v213
    %v219 = vmul.f32 1.0, %v218
    %v220 = vtanh.pop %v200
    %v221 = vmul.f32 %v219, %v163
    %223 = vrot.lane.b32.xlu0 %v220, 64
    %v224 = vpop.permute.xlu0 %223
    %v226 = vmul.f32 %v219, %v224
    %228 = vrot.lane.b32.xlu0 %v226, 32
    %v229 = vpop.permute.xlu0 %228
    %v231 = vadd.f32 %v221, %v229
    %v232 = vtanh.pop %v231
    %234 = vrot.lane.b32.xlu0 %v232, 64
    %v235 = vpop.permute.xlu0 %234
    %v237 = vmul.f32 %v219, %v235
    %239 = vrot.lane.b32.xlu0 %v237, 32
    %v240 = vpop.permute.xlu0 %239
    %s242 = scalar_lea.vmem [#allocation5], 16
    %243 = vst.msk [vmem:[%s242] sm:$0xff] %vm41, %v240
    %s244 = scalar_lea.vmem [#allocation2], 24
    %v245 = vld [vmem:[%s244] sm:$0xff]
    %v246 = vsel %vm41, %v240, 0
    %248 = vmatpush.msra.mxu0 0.0
    %249 = vmatpush.msra.mxu0 0.0
    %250 = vmatpush.msra.mxu0 0.0
    %251 = vmatpush.msra.mxu0 0.0
    %252 = vmatpush.msra.mxu0 0.0
    %253 = vmatpush.msra.mxu0 0.0
    %254 = vmatpush.msra.mxu0 0.0
    %255 = vmatpush.msra.mxu0 0.0
    %256 = vmatpush.msra.mxu0 0.0
    %257 = vmatpush.msra.mxu0 0.0
    %258 = vmatpush.msra.mxu0 0.0
    %259 = vmatpush.msra.mxu0 0.0
    %260 = vmatpush.msra.mxu0 %v39
    %261 = vmatpush.msra.mxu0 %v38
    %262 = vmatpush.msra.mxu0 %v37
    %263 = vmatpush.msra.mxu0 %v36
    %264 = vmatmul.f32.gmra.mxu0 %v246
    %v265 = vpop.f32.mrf.mxu0
    %v266 = vadd.f32 0.0, %v265
    %267 = vdwg.mxu0
    %v268 = vadd.f32 %v245, %v266
    %v269 = vxor.u32 %v268, 2147483648
    %v270 = vmul.f32 %v269, 1.442695
    %v271 = vpow.pop %v270
    %v272 = vadd.f32 %v271, 1.0
    %v273 = vrcp.pop %v272
    %v274 = vmul.f32 %v272, %v273
    %v275 = vsub.f32 1.0, %v274
    %v276 = vmul.f32 %v273, %v275
    %v277 = vadd.f32 %v273, %v276
    %vm278 = vweird.f32 %v272
    %vm279 = vweird.f32 %v273
    %vm280 = vmor %vm278, %vm279
    %v281 = vsel %vm280, %v273, %v277
    %v282 = vand.u32 2147483647, %v272
    %vm283 = vcmp.eq.f32.partialorder %v282, 8.507059e+37
    %v284 = vand.u32 %v272, 2147483648
    %v285 = vor.u32 1.1754944e-38, %v284
    %v286 = vsel %vm283, %v285, %v281
    %v287 = vmul.f32 1.0, %v286
    %v288 = vtanh.pop %v268
    %v289 = vmul.f32 %v287, %v231
    %291 = vrot.lane.b32.xlu0 %v288, 64
    %v292 = vpop.permute.xlu0 %291
    %v294 = vmul.f32 %v287, %v292
    %296 = vrot.lane.b32.xlu0 %v294, 32
    %v297 = vpop.permute.xlu0 %296
    %v299 = vadd.f32 %v289, %v297
    %v300 = vtanh.pop %v299
    %302 = vrot.lane.b32.xlu0 %v300, 64
    %v303 = vpop.permute.xlu0 %302
    %v305 = vmul.f32 %v287, %v303
    %307 = vrot.lane.b32.xlu0 %v305, 32
    %v308 = vpop.permute.xlu0 %307
    %s310 = scalar_lea.vmem [#allocation5], 24
    %311 = vst.msk [vmem:[%s310] sm:$0xff] %vm41, %v308
    %s312 = scalar_lea.vmem [#allocation2], 32
    %v313 = vld [vmem:[%s312] sm:$0xff]
    %v314 = vsel %vm41, %v308, 0
    %316 = vmatpush.msra.mxu0 0.0
    %317 = vmatpush.msra.mxu0 0.0
    %318 = vmatpush.msra.mxu0 0.0
    %319 = vmatpush.msra.mxu0 0.0
    %320 = vmatpush.msra.mxu0 0.0
    %321 = vmatpush.msra.mxu0 0.0
    %322 = vmatpush.msra.mxu0 0.0
    %323 = vmatpush.msra.mxu0 0.0
    %324 = vmatpush.msra.mxu0 0.0
    %325 = vmatpush.msra.mxu0 0.0
    %326 = vmatpush.msra.mxu0 0.0
    %327 = vmatpush.msra.mxu0 0.0
    %328 = vmatpush.msra.mxu0 %v39
    %329 = vmatpush.msra.mxu0 %v38
    %330 = vmatpush.msra.mxu0 %v37
    %331 = vmatpush.msra.mxu0 %v36
    %332 = vmatmul.f32.gmra.mxu0 %v314
    %v333 = vpop.f32.mrf.mxu0
    %v334 = vadd.f32 0.0, %v333
    %335 = vdwg.mxu0
    %v336 = vadd.f32 %v313, %v334
    %v337 = vxor.u32 %v336, 2147483648
    %v338 = vmul.f32 %v337, 1.442695
    %v339 = vpow.pop %v338
    %v340 = vadd.f32 %v339, 1.0
    %v341 = vrcp.pop %v340
    %v342 = vmul.f32 %v340, %v341
    %v343 = vsub.f32 1.0, %v342
    %v344 = vmul.f32 %v341, %v343
    %v345 = vadd.f32 %v341, %v344
    %vm346 = vweird.f32 %v340
    %vm347 = vweird.f32 %v341
    %vm348 = vmor %vm346, %vm347
    %v349 = vsel %vm348, %v341, %v345
    %v350 = vand.u32 2147483647, %v340
    %vm351 = vcmp.eq.f32.partialorder %v350, 8.507059e+37
    %v352 = vand.u32 %v340, 2147483648
    %v353 = vor.u32 1.1754944e-38, %v352
    %v354 = vsel %vm351, %v353, %v349
    %v355 = vmul.f32 1.0, %v354
    %v356 = vtanh.pop %v336
    %v357 = vmul.f32 %v355, %v299
    %359 = vrot.lane.b32.xlu0 %v356, 64
    %v360 = vpop.permute.xlu0 %359
    %v362 = vmul.f32 %v355, %v360
    %364 = vrot.lane.b32.xlu0 %v362, 32
    %v365 = vpop.permute.xlu0 %364
    %v367 = vadd.f32 %v357, %v365
    %v368 = vtanh.pop %v367
    %370 = vrot.lane.b32.xlu0 %v368, 64
    %v371 = vpop.permute.xlu0 %370
    %v373 = vmul.f32 %v355, %v371
    %375 = vrot.lane.b32.xlu0 %v373, 32
    %v376 = vpop.permute.xlu0 %375
    %s378 = scalar_lea.vmem [#allocation5], 32
    %379 = vst.msk [vmem:[%s378] sm:$0xff] %vm41, %v376
    %s380 = scalar_lea.vmem [#allocation2], 40
    %v381 = vld [vmem:[%s380] sm:$0xff]
    %v382 = vsel %vm41, %v376, 0
    %384 = vmatpush.msra.mxu0 0.0
    %385 = vmatpush.msra.mxu0 0.0
    %386 = vmatpush.msra.mxu0 0.0
    %387 = vmatpush.msra.mxu0 0.0
    %388 = vmatpush.msra.mxu0 0.0
    %389 = vmatpush.msra.mxu0 0.0
    %390 = vmatpush.msra.mxu0 0.0
    %391 = vmatpush.msra.mxu0 0.0
    %392 = vmatpush.msra.mxu0 0.0
    %393 = vmatpush.msra.mxu0 0.0
    %394 = vmatpush.msra.mxu0 0.0
    %395 = vmatpush.msra.mxu0 0.0
    %396 = vmatpush.msra.mxu0 %v39
    %397 = vmatpush.msra.mxu0 %v38
    %398 = vmatpush.msra.mxu0 %v37
    %399 = vmatpush.msra.mxu0 %v36
    %400 = vmatmul.f32.gmra.mxu0 %v382
    %v401 = vpop.f32.mrf.mxu0
    %v402 = vadd.f32 0.0, %v401
    %403 = vdwg.mxu0
    %v404 = vadd.f32 %v381, %v402
    %v405 = vxor.u32 %v404, 2147483648
    %v406 = vmul.f32 %v405, 1.442695
    %v407 = vpow.pop %v406
    %v408 = vadd.f32 %v407, 1.0
    %v409 = vrcp.pop %v408
    %v410 = vmul.f32 %v408, %v409
    %v411 = vsub.f32 1.0, %v410
    %v412 = vmul.f32 %v409, %v411
    %v413 = vadd.f32 %v409, %v412
    %vm414 = vweird.f32 %v408
    %vm415 = vweird.f32 %v409
    %vm416 = vmor %vm414, %vm415
    %v417 = vsel %vm416, %v409, %v413
    %v418 = vand.u32 2147483647, %v408
    %vm419 = vcmp.eq.f32.partialorder %v418, 8.507059e+37
    %v420 = vand.u32 %v408, 2147483648
    %v421 = vor.u32 1.1754944e-38, %v420
    %v422 = vsel %vm419, %v421, %v417
    %v423 = vmul.f32 1.0, %v422
    %v424 = vtanh.pop %v404
    %v425 = vmul.f32 %v423, %v367
    %427 = vrot.lane.b32.xlu0 %v424, 64
    %v428 = vpop.permute.xlu0 %427
    %v430 = vmul.f32 %v423, %v428
    %432 = vrot.lane.b32.xlu0 %v430, 32
    %v433 = vpop.permute.xlu0 %432
    %v435 = vadd.f32 %v425, %v433
    %v436 = vtanh.pop %v435
    %438 = vrot.lane.b32.xlu0 %v436, 64
    %v439 = vpop.permute.xlu0 %438
    %v441 = vmul.f32 %v423, %v439
    %443 = vrot.lane.b32.xlu0 %v441, 32
    %v444 = vpop.permute.xlu0 %443
    %s446 = scalar_lea.vmem [#allocation5], 40
    %447 = vst.msk [vmem:[%s446] sm:$0xff] %vm41, %v444
    %s448 = scalar_lea.vmem [#allocation2], 48
    %v449 = vld [vmem:[%s448] sm:$0xff]
    %v450 = vsel %vm41, %v444, 0
    %452 = vmatpush.msra.mxu0 0.0
    %453 = vmatpush.msra.mxu0 0.0
    %454 = vmatpush.msra.mxu0 0.0
    %455 = vmatpush.msra.mxu0 0.0
    %456 = vmatpush.msra.mxu0 0.0
    %457 = vmatpush.msra.mxu0 0.0
    %458 = vmatpush.msra.mxu0 0.0
    %459 = vmatpush.msra.mxu0 0.0
    %460 = vmatpush.msra.mxu0 0.0
    %461 = vmatpush.msra.mxu0 0.0
    %462 = vmatpush.msra.mxu0 0.0
    %463 = vmatpush.msra.mxu0 0.0
    %464 = vmatpush.msra.mxu0 %v39
    %465 = vmatpush.msra.mxu0 %v38
    %466 = vmatpush.msra.mxu0 %v37
    %467 = vmatpush.msra.mxu0 %v36
    %468 = vmatmul.f32.gmra.mxu0 %v450
    %v469 = vpop.f32.mrf.mxu0
    %v470 = vadd.f32 0.0, %v469
    %471 = vdwg.mxu0
    %v472 = vadd.f32 %v449, %v470
    %v473 = vxor.u32 %v472, 2147483648
    %v474 = vmul.f32 %v473, 1.442695
    %v475 = vpow.pop %v474
    %v476 = vadd.f32 %v475, 1.0
    %v477 = vrcp.pop %v476
    %v478 = vmul.f32 %v476, %v477
    %v479 = vsub.f32 1.0, %v478
    %v480 = vmul.f32 %v477, %v479
    %v481 = vadd.f32 %v477, %v480
    %vm482 = vweird.f32 %v476
    %vm483 = vweird.f32 %v477
    %vm484 = vmor %vm482, %vm483
    %v485 = vsel %vm484, %v477, %v481
    %v486 = vand.u32 2147483647, %v476
    %vm487 = vcmp.eq.f32.partialorder %v486, 8.507059e+37
    %v488 = vand.u32 %v476, 2147483648
    %v489 = vor.u32 1.1754944e-38, %v488
    %v490 = vsel %vm487, %v489, %v485
    %v491 = vmul.f32 1.0, %v490
    %v492 = vtanh.pop %v472
    %v493 = vmul.f32 %v491, %v435
    %495 = vrot.lane.b32.xlu0 %v492, 64
    %v496 = vpop.permute.xlu0 %495
    %v498 = vmul.f32 %v491, %v496
    %500 = vrot.lane.b32.xlu0 %v498, 32
    %v501 = vpop.permute.xlu0 %500
    %v503 = vadd.f32 %v493, %v501
    %v504 = vtanh.pop %v503
    %506 = vrot.lane.b32.xlu0 %v504, 64
    %v507 = vpop.permute.xlu0 %506
    %v509 = vmul.f32 %v491, %v507
    %511 = vrot.lane.b32.xlu0 %v509, 32
    %v512 = vpop.permute.xlu0 %511
    %s514 = scalar_lea.vmem [#allocation5], 48
    %515 = vst.msk [vmem:[%s514] sm:$0xff] %vm41, %v512
    %s516 = scalar_lea.vmem [#allocation2], 56
    %v517 = vld [vmem:[%s516] sm:$0xff]
    %v518 = vsel %vm41, %v512, 0
    %520 = vmatpush.msra.mxu0 0.0
    %521 = vmatpush.msra.mxu0 0.0
    %522 = vmatpush.msra.mxu0 0.0
    %523 = vmatpush.msra.mxu0 0.0
    %524 = vmatpush.msra.mxu0 0.0
    %525 = vmatpush.msra.mxu0 0.0
    %526 = vmatpush.msra.mxu0 0.0
    %527 = vmatpush.msra.mxu0 0.0
    %528 = vmatpush.msra.mxu0 0.0
    %529 = vmatpush.msra.mxu0 0.0
    %530 = vmatpush.msra.mxu0 0.0
    %531 = vmatpush.msra.mxu0 0.0
    %532 = vmatpush.msra.mxu0 %v39
    %533 = vmatpush.msra.mxu0 %v38
    %534 = vmatpush.msra.mxu0 %v37
    %535 = vmatpush.msra.mxu0 %v36
    %536 = vmatmul.f32.gmra.mxu0 %v518
    %v537 = vpop.f32.mrf.mxu0
    %v538 = vadd.f32 0.0, %v537
    %539 = vdwg.mxu0
    %v540 = vadd.f32 %v517, %v538
    %v541 = vxor.u32 %v540, 2147483648
    %v542 = vmul.f32 %v541, 1.442695
    %v543 = vpow.pop %v542
    %v544 = vadd.f32 %v543, 1.0
    %v545 = vrcp.pop %v544
    %v546 = vmul.f32 %v544, %v545
    %v547 = vsub.f32 1.0, %v546
    %v548 = vmul.f32 %v545, %v547
    %v549 = vadd.f32 %v545, %v548
    %vm550 = vweird.f32 %v544
    %vm551 = vweird.f32 %v545
    %vm552 = vmor %vm550, %vm551
    %v553 = vsel %vm552, %v545, %v549
    %v554 = vand.u32 2147483647, %v544
    %vm555 = vcmp.eq.f32.partialorder %v554, 8.507059e+37
    %v556 = vand.u32 %v544, 2147483648
    %v557 = vor.u32 1.1754944e-38, %v556
    %v558 = vsel %vm555, %v557, %v553
    %v559 = vmul.f32 1.0, %v558
    %v560 = vtanh.pop %v540
    %v561 = vmul.f32 %v559, %v503
    %563 = vrot.lane.b32.xlu0 %v560, 64
    %v564 = vpop.permute.xlu0 %563
    %v566 = vmul.f32 %v559, %v564
    %568 = vrot.lane.b32.xlu0 %v566, 32
    %v569 = vpop.permute.xlu0 %568
    %v571 = vadd.f32 %v561, %v569
    %v572 = vtanh.pop %v571
    %574 = vrot.lane.b32.xlu0 %v572, 64
    %v575 = vpop.permute.xlu0 %574
    %v577 = vmul.f32 %v559, %v575
    %579 = vrot.lane.b32.xlu0 %v577, 32
    %v580 = vpop.permute.xlu0 %579
    %s582 = scalar_lea.vmem [#allocation5], 56
    %583 = vst.msk [vmem:[%s582] sm:$0xff] %vm41, %v580
    %v584 = vld [vmem:[%s2] sm:$0xff]
    %v585 = vld [vmem:[%s2 + $0x8] sm:$0xff]
    %v586 = vld [vmem:[%s2 + $0x10] sm:$0xff]
    %v587 = vld [vmem:[%s2 + $0x18] sm:$0xff]
    %v588 = vld [vmem:[%s3] sm:$0x1]
    %v590 = vperm.slane %v588, 0
    %v592 = vsel %vm41, %v580, 0
    %594 = vmatpush.msra.mxu0 0.0
    %595 = vmatpush.msra.mxu0 0.0
    %596 = vmatpush.msra.mxu0 0.0
    %597 = vmatpush.msra.mxu0 0.0
    %598 = vmatpush.msra.mxu0 0.0
    %599 = vmatpush.msra.mxu0 0.0
    %600 = vmatpush.msra.mxu0 0.0
    %601 = vmatpush.msra.mxu0 0.0
    %602 = vmatpush.msra.mxu0 0.0
    %603 = vmatpush.msra.mxu0 0.0
    %604 = vmatpush.msra.mxu0 0.0
    %605 = vmatpush.msra.mxu0 0.0
    %606 = vmatpush.msra.mxu0 %v587
    %607 = vmatpush.msra.mxu0 %v586
    %608 = vmatpush.msra.mxu0 %v585
    %609 = vmatpush.msra.mxu0 %v584
    %610 = vmatmul.f32.gmra.mxu0 %v592
    %v611 = vpop.f32.mrf.mxu0
    %v612 = vadd.f32 %v590, %v611
    %613 = vdwg.mxu0
    %vm614 = vcmask 31744
    %615 = vst.msk [vmem:[%s5] sm:$0xff] %vm614, %v612
    // Predicated region
    $region22: #{tpu_custom_call.1} parent=1 // pred_check
      _
    $region23: #{tpu_custom_call.1} parent=1 // pred_check_branch
      %617 = sbr.rel (0) target = $region25
    $region24: #{tpu_custom_call.1} parent=1 // pred_region
      %619 = vsyncadd [#allocation4], 0
      %s620 = sshll.u32 [#allocation5], 4
      %s621 = int_to_ptr.vmem [resolvable:$true] %s620
      %s622 = sshll.u32 %s4, 4
      %s623 = int_to_ptr.hbm [resolvable:$true] %s622
      %628 = dma.vmem_to_hbm [thread:$0]  %s621, 1024, %s623, [#allocation4], 128, 128, 8
    $region25: #{tpu_custom_call.1} parent=1 // pred_fallthru
      _
    // Predicated region
    $region26: #{tpu_custom_call.1} parent=1 // pred_check
      _
    $region27: #{tpu_custom_call.1} parent=1 // pred_check_branch
      %630 = sbr.rel (0) target = $region29
    $region28: #{tpu_custom_call.1} parent=1 // pred_region
      _
    $region29: #{tpu_custom_call.1} parent=1 // pred_fallthru
      _
    // Predicated region
    $region30: #{tpu_custom_call.1} parent=1 // pred_check
      _
    $region31: #{tpu_custom_call.1} parent=1 // pred_check_branch
      %632 = sbr.rel (0) target = $region33
    $region32: #{tpu_custom_call.1} parent=1 // pred_region
      %634 = dma.done [#allocation4], 1024
    $region33: #{tpu_custom_call.1} parent=1 // pred_fallthru
      _
    // Predicated region
    $region34: #{tpu_custom_call.1} parent=1 // pred_check
      _
    $region35: #{tpu_custom_call.1} parent=1 // pred_check_branch
      %636 = sbr.rel (0) target = $region37
    $region36: #{tpu_custom_call.1} parent=1 // pred_region
      _
    $region37: #{tpu_custom_call.1} parent=1 // pred_fallthru
      _
    %637 = vsyncpa [#allocation3], 1
    %638 = vsyncpa [#allocation4], 1

</llo_original>
